<compile_context>
chip_gen: v5e
topology: v5e:2x2
jax: 0.10.0
libtpu: 0.0.40
codegen_flags: <defaults>
</compile_context>

<pallas_src>
import math

import jax
import jax.numpy as jnp
import numpy as np
from jax.experimental import pallas as pl
from jax.experimental.pallas import tpu as pltpu

_HALF_LOG_2PI = 0.5 * math.log(2.0 * math.pi)
_LOG_2 = math.log(2.0)


def _round_up(n, m):
    return ((n + m - 1) // m) * m


# ----------------------------------------------------------------------------- kernel
def policy_kernel(x_ref, w1_ref, w23_ref, w4_ref, b_ref, eps_ref, out_ref):
    Hp = w1_ref.shape[1]          # padded hidden width (multiple of 128)
    Ap = w4_ref.shape[1] // 2     # padded per-head lane group (multiple of 128)
    A = eps_ref.shape[1]
    cdt = w1_ref.dtype            # MXU input dtype (f32 or bf16); accumulation is f32

    x = x_ref[...].astype(cdt)
    eps = eps_ref[...]            # f32

    # 3 hidden layers with ReLU; biases come from the packed (4, BW) slab (f32).
    h = jnp.maximum(
        jnp.dot(x, w1_ref[...], preferred_element_type=jnp.float32)
        + b_ref[0:1, 0:Hp], 0.0)
    h = jnp.maximum(
        jnp.dot(h.astype(cdt), w23_ref[0], preferred_element_type=jnp.float32)
        + b_ref[1:2, 0:Hp], 0.0)
    h = jnp.maximum(
        jnp.dot(h.astype(cdt), w23_ref[1], preferred_element_type=jnp.float32)
        + b_ref[2:3, 0:Hp], 0.0)

    # Fused, 128-lane-aligned head: mu in lane-group 0, logstd in lane-group 1.
    ml = (jnp.dot(h.astype(cdt), w4_ref[...], preferred_element_type=jnp.float32)
          + b_ref[3:4, 0:2 * Ap])
    mu = ml[:, 0:A]                                     # lanes [0:A] of group 0
    logstd = jnp.clip(ml[:, Ap:Ap + A], -20.0, 2.0)     # lanes [0:A] of group 1
    std = jnp.exp(logstd)

    pre = mu + std * eps          # rsample in the base (Normal) space
    action = jnp.tanh(pre)        # TanhTransform
    mean = jnp.tanh(mu)

    # log_prob of TransformedDistribution(Normal, TanhTransform) at `action`, evaluated
    # at the cached base point `pre` (cache_size=1). (pre - mu)/std == eps exactly.
    normal_lp = -0.5 * eps * eps - logstd - _HALF_LOG_2PI
    ladj = 2.0 * (_LOG_2 - pre - jax.nn.softplus(-2.0 * pre))
    logprob = jnp.sum(normal_lp - ladj, axis=1, keepdims=True)

    # Single packed store: [action | mean | logprob] built in-register.
    out_ref[...] = jnp.concatenate([action, mean, logprob], axis=1)


# ----------------------------------------------------------------------------- params
def init_policy_params(key, state_dim, action_dim, hidden_size, *, weight_dtype=jnp.float32):
    """torch.nn.Linear-style init (U[-1/sqrt(fan_in), 1/sqrt(fan_in)]), packed for the kernel.

      w1   : (state_dim, Hp)     Hp = round_up(hidden, 128), zero-padded lanes
      w23  : (2, Hp, Hp)         stacked hidden layers 2 and 3
      w4   : (Hp, 2*Ap)          Ap = round_up(A, 128); mu -> cols [0:A], logstd -> [Ap:Ap+A]
      bias : (4, max(Hp, 2*Ap))  row r = bias of layer r, packed like the weights (kept f32)
    """
    H, A = hidden_size, action_dim
    Hp = _round_up(H, 128)
    Ap = _round_up(A, 128)
    dims = [(state_dim, H), (H, H), (H, H), (H, 2 * A)]
    ws, bs = [], []
    for fan_in, fan_out in dims:
        key, kw, kb = jax.random.split(key, 3)
        bound = 1.0 / math.sqrt(fan_in)
        ws.append(jax.random.uniform(kw, (fan_in, fan_out), jnp.float32, -bound, bound))
        bs.append(jax.random.uniform(kb, (fan_out,), jnp.float32, -bound, bound))
    w1, w2, w3, w4 = ws
    b1, b2, b3, b4 = bs

    w1p = jnp.zeros((state_dim, Hp), jnp.float32).at[:, :H].set(w1)
    w23p = (jnp.zeros((2, Hp, Hp), jnp.float32)
            .at[0, :H, :H].set(w2).at[1, :H, :H].set(w3))
    w4p = (jnp.zeros((Hp, 2 * Ap), jnp.float32)
           .at[:H, 0:A].set(w4[:, :A]).at[:H, Ap:Ap + A].set(w4[:, A:]))
    BW = max(Hp, 2 * Ap)
    bias = (jnp.zeros((4, BW), jnp.float32)
            .at[0, :H].set(b1).at[1, :H].set(b2).at[2, :H].set(b3)
            .at[3, 0:A].set(b4[:A]).at[3, Ap:Ap + A].set(b4[A:]))
    return (w1p.astype(weight_dtype), w23p.astype(weight_dtype),
            w4p.astype(weight_dtype), bias)


def cast_matmul_weights(params, dtype):
    """bf16-MXU mode: cast only the matmul weights; the bias slab (added after f32
    accumulation) and all logstd/std/log-prob arithmetic stay in f32."""
    w1, w23, w4, bias = params
    return (w1.astype(dtype), w23.astype(dtype), w4.astype(dtype), bias)


# ----------------------------------------------------------------------------- wrapper
def _resident_spec(shape, single_buffer):
    index_map = lambda i: (0,) * len(shape)
    if single_buffer and hasattr(pl, "Buffered"):
        # Constant block index: weights are fetched once, so no double-buffering needed.
        return pl.BlockSpec(shape, index_map, pipeline_mode=pl.Buffered(1))
    return pl.BlockSpec(shape, index_map)


def policy_forward(x, params, eps, *, batch_tile=1024):
    """Returns (action, logprob, mean) == Policy.forward(x, get_logprob=True).
    `eps` is the N(0,1) reparameterization noise for dist.rsample()."""
    w1, w23, w4, bias = params
    B, S = x.shape
    A = eps.shape[1]
    Hp = w1.shape[1]
    Ap = w4.shape[1] // 2
    BW = bias.shape[1]
    assert A <= Ap and 2 * Ap <= BW and Hp <= BW, "packed bias/head layout mismatch"
    OW = 2 * A + 1  # packed output lane width: [action | mean | logprob]

    # Batch tiling: big tiles amortize per-step overhead; >=2 steps for large B lets the
    # "parallel" axis shard across v7x's 2 TensorCores; ragged B is padded (never one
    # giant un-pipelined block).
    if B <= 64:
        bt = _round_up(max(B, 1), 8)
    else:
        bt = min(_round_up(batch_tile, 8), _round_up(pl.cdiv(B, 2), 8))
    Bp = _round_up(B, bt)
    if Bp != B:
        x = jnp.pad(x, ((0, Bp - B), (0, 0)))
        eps = jnp.pad(eps, ((0, Bp - B), (0, 0)))
    grid = (Bp // bt,)

    # VMEM budget: single-buffer resident weights once they are large enough to matter
    # (v5e 16 MiB scoped default / v7x 64 MiB physical); derive the scoped limit from
    # the actual weight + tile sizes instead of relying on the per-generation default.
    weight_bytes = sum(int(a.size) * a.dtype.itemsize for a in (w1, w23, w4, bias))
    single_buffer = weight_bytes > (4 << 20)
    io_bytes = 2 * bt * (S + A + OW) * 4              # double-buffered x / eps / out tiles
    tmp_bytes = bt * (2 * Hp + 4 * Ap) * 4            # in-kernel activation temporaries
    wb = weight_bytes if single_buffer else 2 * weight_bytes
    vmem_limit = int(min(max(wb + io_bytes + tmp_bytes + (4 << 20), 32 << 20), 100 << 20))

    packed = pl.pallas_call(
        policy_kernel,
        out_shape=jax.ShapeDtypeStruct((Bp, OW), jnp.float32),
        grid=grid,
        in_specs=[
            pl.BlockSpec((bt, S), lambda i: (i, 0)),          # x
            _resident_spec((S, Hp), single_buffer),           # w1
            _resident_spec((2, Hp, Hp), single_buffer),       # w2 | w3
            _resident_spec((Hp, 2 * Ap), single_buffer),      # fused lane-aligned head
            _resident_spec((4, BW), single_buffer),           # packed biases (f32)
            pl.BlockSpec((bt, A), lambda i: (i, 0)),          # eps
        ],
        out_specs=pl.BlockSpec((bt, OW), lambda i: (i, 0)),
        compiler_params=pltpu.CompilerParams(
            dimension_semantics=("parallel",),
            vmem_limit_bytes=vmem_limit),
    )(x, w1, w23, w4, bias, eps)

    action = packed[:B, 0:A]
    mean = packed[:B, A:2 * A]
    logprob = packed[:B, 2 * A:2 * A + 1]
    return action, logprob, mean


# ----------------------------------------------------------------------------- reference
def _reference_forward(x, params, eps):
    w1, w23, w4, bias = (jnp.asarray(p, jnp.float32) for p in params)
    Hp = w1.shape[1]
    Ap = w4.shape[1] // 2
    A = eps.shape[1]
    h = jnp.maximum(x @ w1 + bias[0, :Hp], 0.0)
    h = jnp.maximum(h @ w23[0] + bias[1, :Hp], 0.0)
    h = jnp.maximum(h @ w23[1] + bias[2, :Hp], 0.0)
    ml = h @ w4 + bias[3, :2 * Ap]
    mu = ml[:, 0:A]
    logstd = jnp.clip(ml[:, Ap:Ap + A], -20.0, 2.0)
    std = jnp.exp(logstd)
    pre = mu + std * eps
    action = jnp.tanh(pre)
    normal_lp = -0.5 * ((pre - mu) / std) ** 2 - logstd - _HALF_LOG_2PI
    ladj = 2.0 * (_LOG_2 - pre - jax.nn.softplus(-2.0 * pre))
    logprob = jnp.sum(normal_lp - ladj, axis=1, keepdims=True)
    return action, logprob, jnp.tanh(mu)


if __name__ == "__main__":
    # Small, forward-consistent shapes: batch=8, state_dim=16, action_dim=4, hidden=32.
    B, STATE_DIM, ACTION_DIM, HIDDEN = 8, 16, 4, 32

    key = jax.random.PRNGKey(0)
    k_params, k_x, k_eps = jax.random.split(key, 3)

    params = init_policy_params(k_params, STATE_DIM, ACTION_DIM, HIDDEN)
    x = jax.random.normal(k_x, (B, STATE_DIM), jnp.float32)
    # rsample noise for the reparameterized Normal draw (deterministic here).
    eps = jax.random.normal(k_eps, (B, ACTION_DIM), jnp.float32)

    # --- f32 path: exact semantics of the torch module.
    action, logprob, mean = policy_forward(x, params, eps)
    jax.block_until_ready((action, logprob, mean))
    ra, rl, rm = _reference_forward(x, params, eps)
    assert np.allclose(np.asarray(action), np.asarray(ra), atol=1e-5)
    assert np.allclose(np.asarray(logprob), np.asarray(rl), atol=1e-4)
    assert np.allclose(np.asarray(mean), np.asarray(rm), atol=1e-5)

    # --- bf16-MXU path (weights/activations bf16 on the MXU, head/log-prob math f32).
    params_bf16 = cast_matmul_weights(params, jnp.bfloat16)
    a16, l16, m16 = policy_forward(x, params_bf16, eps)
    jax.block_until_ready((a16, l16, m16))
    ra16, rl16, rm16 = _reference_forward(x, params_bf16, eps)
    assert np.allclose(np.asarray(a16), np.asarray(ra16), atol=8e-2)
    assert np.allclose(np.asarray(l16), np.asarray(rl16), atol=5e-1)
    assert np.allclose(np.asarray(m16), np.asarray(rm16), atol=8e-2)

    print("KERNEL_OK")
</pallas_src>

<mosaic_0001>
module attributes {stable_mosaic.version = 11 : i64} {
  func.func @policy_kernel(%arg0: i32, %arg1: memref<8x16xf32, #tpu.memory_space<vmem>>, %arg2: memref<16x128xf32, #tpu.memory_space<vmem>>, %arg3: memref<2x128x128xf32, #tpu.memory_space<vmem>>, %arg4: memref<128x256xf32, #tpu.memory_space<vmem>>, %arg5: memref<4x256xf32, #tpu.memory_space<vmem>>, %arg6: memref<8x4xf32, #tpu.memory_space<vmem>>, %arg7: memref<8x9xf32, #tpu.memory_space<vmem>>) attributes {dimension_semantics = [#tpu.dimension_semantics<parallel>], iteration_bounds = array<i64: 1>, scalar_prefetch = 0 : i64, scratch_operands = 0 : i64, tpu.core_type = #tpu.core_type<tc>, window_params = [{transform_indices = @transform_0, window_bounds = array<i64: 8, 16>}, {pipeline_mode = #tpu.pipeline_mode<synchronous>, transform_indices = @transform_1, window_bounds = array<i64: 16, 128>}, {pipeline_mode = #tpu.pipeline_mode<synchronous>, transform_indices = @transform_2, window_bounds = array<i64: 2, 128, 128>}, {pipeline_mode = #tpu.pipeline_mode<synchronous>, transform_indices = @transform_3, window_bounds = array<i64: 128, 256>}, {pipeline_mode = #tpu.pipeline_mode<synchronous>, transform_indices = @transform_4, window_bounds = array<i64: 4, 256>}, {transform_indices = @transform_5, window_bounds = array<i64: 8, 4>}, {transform_indices = @transform_6, window_bounds = array<i64: 8, 9>}]} {
    %c0 = arith.constant 0 : index
    %c0_0 = arith.constant 0 : index
    %0 = vector.load %arg1[%c0, %c0_0] : memref<8x16xf32, #tpu.memory_space<vmem>>, vector<8x16xf32>
    %c0_1 = arith.constant 0 : index
    %c0_2 = arith.constant 0 : index
    %1 = vector.load %arg6[%c0_1, %c0_2] : memref<8x4xf32, #tpu.memory_space<vmem>>, vector<8x4xf32>
    %c0_3 = arith.constant 0 : index
    %c0_4 = arith.constant 0 : index
    %2 = vector.load %arg2[%c0_3, %c0_4] : memref<16x128xf32, #tpu.memory_space<vmem>>, vector<16x128xf32>
    %cst = arith.constant dense<0.000000e+00> : vector<8x128xf32>
    %3 = tpu.matmul %0, %2, %cst {dimension_numbers = #tpu.dot_dimension_numbers<[1], [0], [0], [1], [0, 0, 1, 1], [], []>} : vector<8x16xf32>, vector<16x128xf32>, vector<8x128xf32> -> vector<8x128xf32>
    %c0_5 = arith.constant 0 : index
    %c0_6 = arith.constant 0 : index
    %4 = vector.load %arg5[%c0_5, %c0_6] : memref<4x256xf32, #tpu.memory_space<vmem>>, vector<1x128xf32>
    %5 = vector.broadcast %4 : vector<1x128xf32> to vector<8x128xf32>
    %6 = arith.addf %3, %5 : vector<8x128xf32>
    %cst_7 = arith.constant 0.000000e+00 : f32
    %7 = vector.broadcast %cst_7 : f32 to vector<8x128xf32>
    %8 = arith.maximumf %6, %7 : vector<8x128xf32>
    %c0_8 = arith.constant 0 : index
    %c0_9 = arith.constant 0 : index
    %c0_10 = arith.constant 0 : index
    %9 = vector.load %arg3[%c0_8, %c0_9, %c0_10] : memref<2x128x128xf32, #tpu.memory_space<vmem>>, vector<1x128x128xf32>
    %10 = vector.shape_cast %9 : vector<1x128x128xf32> to vector<128x128xf32>
    %cst_11 = arith.constant dense<0.000000e+00> : vector<8x128xf32>
    %11 = tpu.matmul %8, %10, %cst_11 {dimension_numbers = #tpu.dot_dimension_numbers<[1], [0], [0], [1], [0, 0, 1, 1], [], []>} : vector<8x128xf32>, vector<128x128xf32>, vector<8x128xf32> -> vector<8x128xf32>
    %c1 = arith.constant 1 : index
    %c0_12 = arith.constant 0 : index
    %12 = vector.load %arg5[%c1, %c0_12] : memref<4x256xf32, #tpu.memory_space<vmem>>, vector<1x128xf32>
    %13 = vector.broadcast %12 : vector<1x128xf32> to vector<8x128xf32>
    %14 = arith.addf %11, %13 : vector<8x128xf32>
    %cst_13 = arith.constant 0.000000e+00 : f32
    %15 = vector.broadcast %cst_13 : f32 to vector<8x128xf32>
    %16 = arith.maximumf %14, %15 : vector<8x128xf32>
    %c1_14 = arith.constant 1 : index
    %c0_15 = arith.constant 0 : index
    %c0_16 = arith.constant 0 : index
    %17 = vector.load %arg3[%c1_14, %c0_15, %c0_16] : memref<2x128x128xf32, #tpu.memory_space<vmem>>, vector<1x128x128xf32>
    %18 = vector.shape_cast %17 : vector<1x128x128xf32> to vector<128x128xf32>
    %cst_17 = arith.constant dense<0.000000e+00> : vector<8x128xf32>
    %19 = tpu.matmul %16, %18, %cst_17 {dimension_numbers = #tpu.dot_dimension_numbers<[1], [0], [0], [1], [0, 0, 1, 1], [], []>} : vector<8x128xf32>, vector<128x128xf32>, vector<8x128xf32> -> vector<8x128xf32>
    %c2 = arith.constant 2 : index
    %c0_18 = arith.constant 0 : index
    %20 = vector.load %arg5[%c2, %c0_18] : memref<4x256xf32, #tpu.memory_space<vmem>>, vector<1x128xf32>
    %21 = vector.broadcast %20 : vector<1x128xf32> to vector<8x128xf32>
    %22 = arith.addf %19, %21 : vector<8x128xf32>
    %cst_19 = arith.constant 0.000000e+00 : f32
    %23 = vector.broadcast %cst_19 : f32 to vector<8x128xf32>
    %24 = arith.maximumf %22, %23 : vector<8x128xf32>
    %c0_20 = arith.constant 0 : index
    %c0_21 = arith.constant 0 : index
    %25 = vector.load %arg4[%c0_20, %c0_21] : memref<128x256xf32, #tpu.memory_space<vmem>>, vector<128x256xf32>
    %cst_22 = arith.constant dense<0.000000e+00> : vector<8x256xf32>
    %26 = tpu.matmul %24, %25, %cst_22 {dimension_numbers = #tpu.dot_dimension_numbers<[1], [0], [0], [1], [0, 0, 1, 1], [], []>} : vector<8x128xf32>, vector<128x256xf32>, vector<8x256xf32> -> vector<8x256xf32>
    %c3 = arith.constant 3 : index
    %c0_23 = arith.constant 0 : index
    %27 = vector.load %arg5[%c3, %c0_23] : memref<4x256xf32, #tpu.memory_space<vmem>>, vector<1x256xf32>
    %28 = vector.broadcast %27 : vector<1x256xf32> to vector<8x256xf32>
    %29 = arith.addf %26, %28 : vector<8x256xf32>
    %30 = vector.extract_strided_slice %29 {offsets = [0, 0], sizes = [8, 4], strides = [1, 1]} : vector<8x256xf32> to vector<8x4xf32>
    %31 = vector.extract_strided_slice %29 {offsets = [0, 128], sizes = [8, 4], strides = [1, 1]} : vector<8x256xf32> to vector<8x4xf32>
    %cst_24 = arith.constant -2.000000e+01 : f32
    %cst_25 = arith.constant 2.000000e+00 : f32
    %32 = vector.broadcast %cst_24 : f32 to vector<8x4xf32>
    %33 = arith.maximumf %32, %31 : vector<8x4xf32>
    %34 = vector.broadcast %cst_25 : f32 to vector<8x4xf32>
    %35 = arith.minimumf %34, %33 : vector<8x4xf32>
    %36 = math.exp %35 : vector<8x4xf32>
    %37 = arith.mulf %36, %1 : vector<8x4xf32>
    %38 = arith.addf %30, %37 : vector<8x4xf32>
    %39 = math.tanh %38 : vector<8x4xf32>
    %40 = math.tanh %30 : vector<8x4xf32>
    %cst_26 = arith.constant -5.000000e-01 : f32
    %41 = vector.broadcast %cst_26 : f32 to vector<8x4xf32>
    %42 = arith.mulf %41, %1 : vector<8x4xf32>
    %43 = arith.mulf %42, %1 : vector<8x4xf32>
    %44 = arith.subf %43, %35 : vector<8x4xf32>
    %cst_27 = arith.constant 0.918938517 : f32
    %45 = vector.broadcast %cst_27 : f32 to vector<8x4xf32>
    %46 = arith.subf %44, %45 : vector<8x4xf32>
    %cst_28 = arith.constant 0.693147182 : f32
    %47 = vector.broadcast %cst_28 : f32 to vector<8x4xf32>
    %48 = arith.subf %47, %38 : vector<8x4xf32>
    %cst_29 = arith.constant -2.000000e+00 : f32
    %49 = vector.broadcast %cst_29 : f32 to vector<8x4xf32>
    %50 = arith.mulf %49, %38 : vector<8x4xf32>
    %cst_30 = arith.constant 0.000000e+00 : f32
    %51 = vector.broadcast %cst_30 : f32 to vector<8x4xf32>
    %52 = arith.maximumf %50, %51 : vector<8x4xf32>
    %53 = vector.broadcast %cst_30 : f32 to vector<8x4xf32>
    %54 = arith.subf %50, %53 : vector<8x4xf32>
    %55 = arith.cmpf one, %54, %54 : vector<8x4xf32>
    %56 = vector.broadcast %cst_30 : f32 to vector<8x4xf32>
    %57 = arith.addf %50, %56 : vector<8x4xf32>
    %58 = math.absf %54 : vector<8x4xf32>
    %cst_31 = arith.constant 0.000000e+00 : f32
    %59 = vector.broadcast %cst_31 : f32 to vector<8x4xf32>
    %60 = arith.subf %59, %58 : vector<8x4xf32>
    %61 = math.exp %60 : vector<8x4xf32>
    %62 = math.log1p %61 : vector<8x4xf32>
    %63 = arith.addf %52, %62 : vector<8x4xf32>
    %64 = arith.select %55, %57, %63 : vector<8x4xi1>, vector<8x4xf32>
    %65 = arith.subf %48, %64 : vector<8x4xf32>
    %cst_32 = arith.constant 2.000000e+00 : f32
    %66 = vector.broadcast %cst_32 : f32 to vector<8x4xf32>
    %67 = arith.mulf %66, %65 : vector<8x4xf32>
    %68 = arith.subf %46, %67 : vector<8x4xf32>
    %cst_33 = arith.constant dense<0.000000e+00> : vector<8xf32>
    %69 = vector.multi_reduction <add>, %68, %cst_33 [1] : vector<8x4xf32> to vector<8xf32>
    %70 = vector.shape_cast %69 : vector<8xf32> to vector<8x1xf32>
    %71 = tpu.concatenate %39, %40, %70 in 1 : vector<8x4xf32>, vector<8x4xf32>, vector<8x1xf32> -> vector<8x9xf32>
    %c0_34 = arith.constant 0 : index
    %c0_35 = arith.constant 0 : index
    %72 = vector.load %arg7[%c0_34, %c0_35] : memref<8x9xf32, #tpu.memory_space<vmem>>, vector<8x9xf32>
    tpu.vector_store %arg7[%c0_34, %c0_35], %71 {strides = array<i32>} : memref<8x9xf32, #tpu.memory_space<vmem>>, vector<8x9xf32>,
    return
  }
  func.func @transform_0(%arg0: i32) -> (i32, i32) {
    %c0_i32 = arith.constant 0 : i32
    %c0_i32_0 = arith.constant 0 : i32
    return %arg0, %c0_i32 : i32, i32
  }
  func.func @transform_1(%arg0: i32) -> (i32, i32) {
    %c0_i32 = arith.constant 0 : i32
    %c0_i32_0 = arith.constant 0 : i32
    %c0_i32_1 = arith.constant 0 : i32
    return %c0_i32, %c0_i32_0 : i32, i32
  }
  func.func @transform_2(%arg0: i32) -> (i32, i32, i32) {
    %c0_i32 = arith.constant 0 : i32
    %c0_i32_0 = arith.constant 0 : i32
    %c0_i32_1 = arith.constant 0 : i32
    %c0_i32_2 = arith.constant 0 : i32
    return %c0_i32, %c0_i32_0, %c0_i32_1 : i32, i32, i32
  }
  func.func @transform_3(%arg0: i32) -> (i32, i32) {
    %c0_i32 = arith.constant 0 : i32
    %c0_i32_0 = arith.constant 0 : i32
    %c0_i32_1 = arith.constant 0 : i32
    return %c0_i32, %c0_i32_0 : i32, i32
  }
  func.func @transform_4(%arg0: i32) -> (i32, i32) {
    %c0_i32 = arith.constant 0 : i32
    %c0_i32_0 = arith.constant 0 : i32
    %c0_i32_1 = arith.constant 0 : i32
    return %c0_i32, %c0_i32_0 : i32, i32
  }
  func.func @transform_5(%arg0: i32) -> (i32, i32) {
    %c0_i32 = arith.constant 0 : i32
    %c0_i32_0 = arith.constant 0 : i32
    return %arg0, %c0_i32 : i32, i32
  }
  func.func @transform_6(%arg0: i32) -> (i32, i32) {
    %c0_i32 = arith.constant 0 : i32
    %c0_i32_0 = arith.constant 0 : i32
    return %arg0, %c0_i32 : i32, i32
  }
}

</mosaic_0001>

<llo_original>
// kernel: tpu_custom_call.1
$region0: #{tpu_custom_call.1}
  #allocation0 [shape = 'u32[]', space=smem, size = 0x4, offset = 0x4, fixed_abs, tag = 'smem constant byte address 0x4 - core index']
  #allocation1 [shape = 'u32[72,128]{1,0:T(1,128)}', space=vmem, size = 0x9000, scoped, tag = 'internal scratch']
  %s0 = inlined_call_operand.vmem [shape: f32[8,16], index: 0, kind: input, shape index: {}]
  %s1 = inlined_call_operand.hbm [shape: f32[16,128], index: 1, kind: input, shape index: {}]
  %s2 = inlined_call_operand.hbm [shape: f32[2,128,128], index: 2, kind: input, shape index: {}]
  %s3 = inlined_call_operand.hbm [shape: f32[128,256], index: 3, kind: input, shape index: {}]
  %s4 = inlined_call_operand.hbm [shape: f32[4,256], index: 4, kind: input, shape index: {}]
  %s5 = inlined_call_operand.vmem [shape: f32[8,4], index: 5, kind: input, shape index: {}]
  %s6 = inlined_call_operand.hbm [shape: f32[8,9], index: 6, kind: output, shape index: {}]
  %s7 = sld [smem:[#allocation0]]
  $region50: #{tpu_custom_call.1} parent=0
    _
  %s9 = ssub.s32 1, %s7
  %s10 = scalar_select 0, %s9, %s7
  $region1: #{tpu_custom_call.1} parent=0
    #allocation2 [shape = 'u8[8192]{0}', space=vmem, size = 0x2000, scoped, tag = 'input window, operand 1, single buffered']
    #allocation3 [shape = 's32[1]{0}', space=sflag, size = 0x4, scoped, tag = 'scoped memory for tpu_custom_call.1']
    #allocation4 [shape = 's32[1]{0}', space=sflag, size = 0x4, scoped, tag = 'scoped memory for tpu_custom_call.1']
    #allocation5 [shape = 'u8[131072]{0}', space=vmem, size = 0x20000, scoped, tag = 'input window, operand 2, single buffered']
    #allocation6 [shape = 's32[1]{0}', space=sflag, size = 0x4, scoped, tag = 'scoped memory for tpu_custom_call.1']
    #allocation7 [shape = 'u8[131072]{0}', space=vmem, size = 0x20000, scoped, tag = 'input window, operand 3, single buffered']
    #allocation8 [shape = 'u8[4096]{0}', space=vmem, size = 0x1000, scoped, tag = 'input window, operand 4, single buffered']
    #allocation9 [shape = 's32[1]{0}', space=sflag, size = 0x4, scoped, tag = 'scoped memory for tpu_custom_call.1']
    #allocation10 [shape = 'u8[4096]{0}', space=vmem, size = 0x1000, scoped, tag = 'output window, operand 0, single buffered']
    %11 = vsyncpa [#allocation3], 0
    %12 = vsyncpa [#allocation6], 0
    %13 = vsyncpa [#allocation9], 0
    %14 = vsyncpa [#allocation4], 0
    // Predicated region
    $region2: #{tpu_custom_call.1} parent=1 // pred_check
      _
    $region3: #{tpu_custom_call.1} parent=1 // pred_check_branch
      %16 = sbr.rel (0) target = $region5
    $region4: #{tpu_custom_call.1} parent=1 // pred_region
      _
    $region5: #{tpu_custom_call.1} parent=1 // pred_fallthru
      _
    // Predicated region
    $region6: #{tpu_custom_call.1} parent=1 // pred_check
      _
    $region7: #{tpu_custom_call.1} parent=1 // pred_check_branch
      %18 = sbr.rel (0) target = $region9
    $region8: #{tpu_custom_call.1} parent=1 // pred_region
      %20 = vsyncadd [#allocation3], 0
      %s21 = sshll.u32 %s1, 4
      %s22 = int_to_ptr.hbm [resolvable:$true] %s21
      %s23 = sshll.u32 [#allocation2], 4
      %s24 = int_to_ptr.vmem [resolvable:$true] %s23
      %29 = dma.hbm_to_vmem [thread:$0]  %s22, 256, %s24, [#allocation3], 128, 128, 8
    $region9: #{tpu_custom_call.1} parent=1 // pred_fallthru
      _
    // Predicated region
    $region10: #{tpu_custom_call.1} parent=1 // pred_check
      _
    $region11: #{tpu_custom_call.1} parent=1 // pred_check_branch
      %31 = sbr.rel (0) target = $region13
    $region12: #{tpu_custom_call.1} parent=1 // pred_region
      %33 = vsyncadd [#allocation6], 0
      %s34 = sshll.u32 %s2, 4
      %s35 = int_to_ptr.hbm [resolvable:$true] %s34
      %s36 = sshll.u32 [#allocation5], 4
      %s37 = int_to_ptr.vmem [resolvable:$true] %s36
      %42 = dma.hbm_to_vmem [thread:$0]  %s35, 4096, %s37, [#allocation6], 128, 128, 8
    $region13: #{tpu_custom_call.1} parent=1 // pred_fallthru
      _
    // Predicated region
    $region14: #{tpu_custom_call.1} parent=1 // pred_check
      _
    $region15: #{tpu_custom_call.1} parent=1 // pred_check_branch
      %44 = sbr.rel (0) target = $region17
    $region16: #{tpu_custom_call.1} parent=1 // pred_region
      %46 = vsyncadd [#allocation6], 0
      %s47 = sshll.u32 %s3, 4
      %s48 = int_to_ptr.hbm [resolvable:$true] %s47
      %s49 = sshll.u32 [#allocation7], 4
      %s50 = int_to_ptr.vmem [resolvable:$true] %s49
      %55 = dma.hbm_to_vmem [thread:$0]  %s48, 4096, %s50, [#allocation6], 256, 256, 16
    $region17: #{tpu_custom_call.1} parent=1 // pred_fallthru
      _
    // Predicated region
    $region18: #{tpu_custom_call.1} parent=1 // pred_check
      _
    $region19: #{tpu_custom_call.1} parent=1 // pred_check_branch
      %57 = sbr.rel (0) target = $region21
    $region20: #{tpu_custom_call.1} parent=1 // pred_region
      %59 = vsyncadd [#allocation9], 0
      %s61 = sshll.u32 %s4, 4
      %s62 = int_to_ptr.hbm [resolvable:$true] %s61
      %s63 = sshll.u32 [#allocation8], 4
      %s64 = int_to_ptr.vmem [resolvable:$true] %s63
      %66 = dma.hbm_to_vmem [thread:$0]  %s62, 128, %s64, [#allocation9]
    $region21: #{tpu_custom_call.1} parent=1 // pred_fallthru
      _
    // Predicated region
    $region22: #{tpu_custom_call.1} parent=1 // pred_check
      _
    $region23: #{tpu_custom_call.1} parent=1 // pred_check_branch
      %68 = sbr.rel (0) target = $region25
    $region24: #{tpu_custom_call.1} parent=1 // pred_region
      _
    $region25: #{tpu_custom_call.1} parent=1 // pred_fallthru
      _
    // Predicated region
    $region26: #{tpu_custom_call.1} parent=1 // pred_check
      _
    $region27: #{tpu_custom_call.1} parent=1 // pred_check_branch
      %70 = sbr.rel (0) target = $region29
    $region28: #{tpu_custom_call.1} parent=1 // pred_region
      %72 = dma.done [#allocation3], 256
    $region29: #{tpu_custom_call.1} parent=1 // pred_fallthru
      _
    // Predicated region
    $region30: #{tpu_custom_call.1} parent=1 // pred_check
      _
    $region31: #{tpu_custom_call.1} parent=1 // pred_check_branch
      %74 = sbr.rel (0) target = $region33
    $region32: #{tpu_custom_call.1} parent=1 // pred_region
      %76 = dma.done [#allocation6], 4096
    $region33: #{tpu_custom_call.1} parent=1 // pred_fallthru
      _
    // Predicated region
    $region34: #{tpu_custom_call.1} parent=1 // pred_check
      _
    $region35: #{tpu_custom_call.1} parent=1 // pred_check_branch
      %78 = sbr.rel (0) target = $region37
    $region36: #{tpu_custom_call.1} parent=1 // pred_region
      %80 = dma.done [#allocation6], 4096
    $region37: #{tpu_custom_call.1} parent=1 // pred_fallthru
      _
    // Predicated region
    $region38: #{tpu_custom_call.1} parent=1 // pred_check
      _
    $region39: #{tpu_custom_call.1} parent=1 // pred_check_branch
      %82 = sbr.rel (0) target = $region41
    $region40: #{tpu_custom_call.1} parent=1 // pred_region
      %84 = dma.done [#allocation9], 128
    $region41: #{tpu_custom_call.1} parent=1 // pred_fallthru
      _
    %v85 = vld [vmem:[%s0] sm:$0xff]
    %v86 = vld [vmem:[%s5] sm:$0xff]
    %v87 = vld [vmem:[#allocation2] sm:$0xff]
    %v88 = vld [vmem:[#allocation2 + $0x8] sm:$0xff]
    %v89 = vld [vmem:[#allocation8] sm:$0x1]
    %v90 = vperm.slane %v89, 0
    %vm91 = vcmask 130048
    %v93 = vsel %vm91, %v85, 0
    %95 = vmatpush.msra.mxu0 0.0
    %96 = vmatpush.msra.mxu0 0.0
    %97 = vmatpush.msra.mxu0 0.0
    %98 = vmatpush.msra.mxu0 0.0
    %99 = vmatpush.msra.mxu0 0.0
    %100 = vmatpush.msra.mxu0 0.0
    %101 = vmatpush.msra.mxu0 0.0
    %102 = vmatpush.msra.mxu0 0.0
    %103 = vmatpush.msra.mxu0 0.0
    %104 = vmatpush.msra.mxu0 0.0
    %105 = vmatpush.msra.mxu0 0.0
    %106 = vmatpush.msra.mxu0 0.0
    %107 = vmatpush.msra.mxu0 0.0
    %108 = vmatpush.msra.mxu0 0.0
    %109 = vmatpush.msra.mxu0 %v88
    %110 = vmatpush.msra.mxu0 %v87
    %111 = vmatmul.f32.gmra.mxu0 %v93
    %v112 = vpop.f32.mrf.mxu0
    %v113 = vadd.f32 %v90, %v112
    %114 = vdwg.mxu0
    %v115 = vmax.f32 %v113, 0.0
    %v116 = vld [vmem:[#allocation5] sm:$0xff]
    %v117 = vld [vmem:[#allocation5 + $0x8] sm:$0xff]
    %v118 = vld [vmem:[#allocation5 + $0x10] sm:$0xff]
    %v119 = vld [vmem:[#allocation5 + $0x18] sm:$0xff]
    %v120 = vld [vmem:[#allocation5 + $0x20] sm:$0xff]
    %v121 = vld [vmem:[#allocation5 + $0x28] sm:$0xff]
    %v122 = vld [vmem:[#allocation5 + $0x30] sm:$0xff]
    %v123 = vld [vmem:[#allocation5 + $0x38] sm:$0xff]
    %v124 = vld [vmem:[#allocation5 + $0x40] sm:$0xff]
    %v125 = vld [vmem:[#allocation5 + $0x48] sm:$0xff]
    %v126 = vld [vmem:[#allocation5 + $0x50] sm:$0xff]
    %v127 = vld [vmem:[#allocation5 + $0x58] sm:$0xff]
    %v128 = vld [vmem:[#allocation5 + $0x60] sm:$0xff]
    %v129 = vld [vmem:[#allocation5 + $0x68] sm:$0xff]
    %v130 = vld [vmem:[#allocation5 + $0x70] sm:$0xff]
    %v131 = vld [vmem:[#allocation5 + $0x78] sm:$0xff]
    %v132 = vld [vmem:[#allocation8 + $0x1] sm:$0x1]
    %v133 = vperm.slane %v132, 0
    %134 = vmatpush.msra.mxu0 %v131
    %135 = vmatpush.msra.mxu0 %v130
    %136 = vmatpush.msra.mxu0 %v129
    %137 = vmatpush.msra.mxu0 %v128
    %138 = vmatpush.msra.mxu0 %v127
    %139 = vmatpush.msra.mxu0 %v126
    %140 = vmatpush.msra.mxu0 %v125
    %141 = vmatpush.msra.mxu0 %v124
    %142 = vmatpush.msra.mxu0 %v123
    %143 = vmatpush.msra.mxu0 %v122
    %144 = vmatpush.msra.mxu0 %v121
    %145 = vmatpush.msra.mxu0 %v120
    %146 = vmatpush.msra.mxu0 %v119
    %147 = vmatpush.msra.mxu0 %v118
    %148 = vmatpush.msra.mxu0 %v117
    %149 = vmatpush.msra.mxu0 %v116
    %150 = vmatmul.f32.gmra.mxu0 %v115
    %v151 = vpop.f32.mrf.mxu0
    %v152 = vadd.f32 %v133, %v151
    %153 = vdwg.mxu0
    %v154 = vmax.f32 %v152, 0.0
    %s155 = scalar_lea.vmem [#allocation5], 128
    %v156 = vld [vmem:[%s155] sm:$0xff]
    %v157 = vld [vmem:[%s155 + $0x8] sm:$0xff]
    %v158 = vld [vmem:[%s155 + $0x10] sm:$0xff]
    %v159 = vld [vmem:[%s155 + $0x18] sm:$0xff]
    %v160 = vld [vmem:[%s155 + $0x20] sm:$0xff]
    %v161 = vld [vmem:[%s155 + $0x28] sm:$0xff]
    %v162 = vld [vmem:[%s155 + $0x30] sm:$0xff]
    %v163 = vld [vmem:[%s155 + $0x38] sm:$0xff]
    %v164 = vld [vmem:[%s155 + $0x40] sm:$0xff]
    %v165 = vld [vmem:[%s155 + $0x48] sm:$0xff]
    %v166 = vld [vmem:[%s155 + $0x50] sm:$0xff]
    %v167 = vld [vmem:[%s155 + $0x58] sm:$0xff]
    %v168 = vld [vmem:[%s155 + $0x60] sm:$0xff]
    %v169 = vld [vmem:[%s155 + $0x68] sm:$0xff]
    %v170 = vld [vmem:[%s155 + $0x70] sm:$0xff]
    %v171 = vld [vmem:[%s155 + $0x78] sm:$0xff]
    %v172 = vld [vmem:[#allocation8 + $0x2] sm:$0x1]
    %v173 = vperm.slane %v172, 0
    %174 = vmatpush.msra.mxu0 %v171
    %175 = vmatpush.msra.mxu0 %v170
    %176 = vmatpush.msra.mxu0 %v169
    %177 = vmatpush.msra.mxu0 %v168
    %178 = vmatpush.msra.mxu0 %v167
    %179 = vmatpush.msra.mxu0 %v166
    %180 = vmatpush.msra.mxu0 %v165
    %181 = vmatpush.msra.mxu0 %v164
    %182 = vmatpush.msra.mxu0 %v163
    %183 = vmatpush.msra.mxu0 %v162
    %184 = vmatpush.msra.mxu0 %v161
    %185 = vmatpush.msra.mxu0 %v160
    %186 = vmatpush.msra.mxu0 %v159
    %187 = vmatpush.msra.mxu0 %v158
    %188 = vmatpush.msra.mxu0 %v157
    %189 = vmatpush.msra.mxu0 %v156
    %190 = vmatmul.f32.gmra.mxu0 %v154
    %v191 = vpop.f32.mrf.mxu0
    %v192 = vadd.f32 %v173, %v191
    %193 = vdwg.mxu0
    %v194 = vmax.f32 %v192, 0.0
    %v195 = vld [vmem:[#allocation7] sm:$0xff]
    %v196 = vld [vmem:[#allocation7 + $0x8] sm:$0xff]
    %v197 = vld [vmem:[#allocation7 + $0x10] sm:$0xff]
    %v198 = vld [vmem:[#allocation7 + $0x18] sm:$0xff]
    %v199 = vld [vmem:[#allocation7 + $0x20] sm:$0xff]
    %v200 = vld [vmem:[#allocation7 + $0x28] sm:$0xff]
    %v201 = vld [vmem:[#allocation7 + $0x30] sm:$0xff]
    %v202 = vld [vmem:[#allocation7 + $0x38] sm:$0xff]
    %v203 = vld [vmem:[#allocation7 + $0x40] sm:$0xff]
    %v204 = vld [vmem:[#allocation7 + $0x48] sm:$0xff]
    %v205 = vld [vmem:[#allocation7 + $0x50] sm:$0xff]
    %v206 = vld [vmem:[#allocation7 + $0x58] sm:$0xff]
    %v207 = vld [vmem:[#allocation7 + $0x60] sm:$0xff]
    %v208 = vld [vmem:[#allocation7 + $0x68] sm:$0xff]
    %v209 = vld [vmem:[#allocation7 + $0x70] sm:$0xff]
    %v210 = vld [vmem:[#allocation7 + $0x78] sm:$0xff]
    %v211 = vld [vmem:[#allocation7 + $0x80] sm:$0xff]
    %v212 = vld [vmem:[#allocation7 + $0x88] sm:$0xff]
    %v213 = vld [vmem:[#allocation7 + $0x90] sm:$0xff]
    %v214 = vld [vmem:[#allocation7 + $0x98] sm:$0xff]
    %v215 = vld [vmem:[#allocation7 + $0xa0] sm:$0xff]
    %v216 = vld [vmem:[#allocation7 + $0xa8] sm:$0xff]
    %v217 = vld [vmem:[#allocation7 + $0xb0] sm:$0xff]
    %v218 = vld [vmem:[#allocation7 + $0xb8] sm:$0xff]
    %v219 = vld [vmem:[#allocation7 + $0xc0] sm:$0xff]
    %v220 = vld [vmem:[#allocation7 + $0xc8] sm:$0xff]
    %v221 = vld [vmem:[#allocation7 + $0xd0] sm:$0xff]
    %v222 = vld [vmem:[#allocation7 + $0xd8] sm:$0xff]
    %v223 = vld [vmem:[#allocation7 + $0xe0] sm:$0xff]
    %v224 = vld [vmem:[#allocation7 + $0xe8] sm:$0xff]
    %v225 = vld [vmem:[#allocation7 + $0xf0] sm:$0xff]
    %v226 = vld [vmem:[#allocation7 + $0xf8] sm:$0xff]
    %s227 = scalar_lea.vmem [#allocation8], 3
    %v228 = vld [vmem:[%s227] ss:$4 sm:$0x3]
    %v230 = vperm.slane %v228, 0
    %v231 = vperm.slane %v228, 1
    %234 = vmatpush.msra.mxu0 %v225
    %235 = vmatpush.msra.mxu0 %v223
    %236 = vmatpush.msra.mxu0 %v221
    %237 = vmatpush.msra.mxu0 %v219
    %238 = vmatpush.msra.mxu0 %v217
    %239 = vmatpush.msra.mxu0 %v215
    %240 = vmatpush.msra.mxu0 %v213
    %241 = vmatpush.msra.mxu0 %v211
    %242 = vmatpush.msra.mxu0 %v209
    %243 = vmatpush.msra.mxu0 %v207
    %244 = vmatpush.msra.mxu0 %v205
    %245 = vmatpush.msra.mxu0 %v203
    %246 = vmatpush.msra.mxu0 %v201
    %247 = vmatpush.msra.mxu0 %v199
    %248 = vmatpush.msra.mxu0 %v197
    %249 = vmatpush.msra.mxu0 %v195
    %250 = vmatmul.f32.gmra.mxu0 %v194
    %v251 = vpop.f32.mrf.mxu0
    %v252 = vadd.f32 %v230, %v251
    %253 = vdwg.mxu0
    %254 = vmatpush.msra.mxu0 %v226
    %255 = vmatpush.msra.mxu0 %v224
    %256 = vmatpush.msra.mxu0 %v222
    %257 = vmatpush.msra.mxu0 %v220
    %258 = vmatpush.msra.mxu0 %v218
    %259 = vmatpush.msra.mxu0 %v216
    %260 = vmatpush.msra.mxu0 %v214
    %261 = vmatpush.msra.mxu0 %v212
    %262 = vmatpush.msra.mxu0 %v210
    %263 = vmatpush.msra.mxu0 %v208
    %264 = vmatpush.msra.mxu0 %v206
    %265 = vmatpush.msra.mxu0 %v204
    %266 = vmatpush.msra.mxu0 %v202
    %267 = vmatpush.msra.mxu0 %v200
    %268 = vmatpush.msra.mxu0 %v198
    %269 = vmatpush.msra.mxu0 %v196
    %270 = vmatmul.f32.gmra.mxu0 %v194
    %v271 = vpop.f32.mrf.mxu0
    %v272 = vadd.f32 %v231, %v271
    %273 = vdwg.mxu0
    %v274 = vmax.f32 %v272, -20.0
    %v275 = vmin.f32 %v274, 2.0
    %v276 = vmul.f32 %v275, 1.442695
    %v277 = vpow.pop %v276
    %v278 = vmul.f32 %v277, %v86
    %v279 = vadd.f32 %v252, %v278
    %v280 = vtanh.pop %v279
    %v281 = vtanh.pop %v252
    %v282 = vmul.f32 %v86, -0.5
    %v283 = vmul.f32 %v282, %v86
    %v284 = vsub.f32 %v283, %v275
    %v285 = vsub.f32 %v284, 0.9189385
    %v286 = vsub.f32 0.6931472, %v279
    %v287 = vmul.f32 %v279, -2.0
    %v288 = vmax.f32 %v287, 0.0
    %vm289 = vcmp.ne.f32.partialorder %v287, %v287
    %v290 = vadd.f32 %v287, 0.0
    %v291 = vand.u32 2147483647, %v287
    %v292 = vsub.f32 0.0, %v291
    %v293 = vmul.f32 %v292, 1.442695
    %v294 = vpow.pop %v293
    %v295 = vadd.f32 %v294, 1.0
    %v296 = vlog2.pop %v295
    %v297 = vmul.f32 %v296, 0.6931472
    %v298 = vmul.f32 -0.5, %v294
    %v299 = vadd.f32 %v298, 1.0
    %v300 = vmul.f32 %v299, %v294
    %v301 = vand.u32 2147483647, %v294
    %vm302 = vcmp.lt.f32.partialorder %v301, 0.0004427343
    %v303 = vsel %vm302, %v300, %v297
    %v304 = vadd.f32 %v288, %v303
    %v305 = vsel %vm289, %v290, %v304
    %v306 = vsub.f32 %v286, %v305
    %v307 = vmul.f32 %v306, 2.0
    %v308 = vsub.f32 %v285, %v307
    %vm309 = vcmask 31744
    %v310 = vsel %vm309, %v308, 0.0
    %311 = vadd.xlane.f32.xlu0 %v310
    %v312 = vpop.xlane.xlu0 %311
    %314 = vrot.lane.b32.xlu0 %v281, 4
    %v315 = vpop.permute.xlu0 %314
    %v317 = vsel %vm309, %v280, %v315
    %vm318 = vcmask 64512
    %v319 = vsel %vm318, %v317, %v312
    %vm320 = vcmask 72704
    %321 = vst.msk [vmem:[#allocation10] sm:$0xff] %vm320, %v319
    // Predicated region
    $region42: #{tpu_custom_call.1} parent=1 // pred_check
      _
    $region43: #{tpu_custom_call.1} parent=1 // pred_check_branch
      %323 = sbr.rel (0) target = $region45
    $region44: #{tpu_custom_call.1} parent=1 // pred_region
      %325 = vsyncadd [#allocation4], 0
      %s327 = sshll.u32 [#allocation10], 4
      %s328 = int_to_ptr.vmem [resolvable:$true] %s327
      %s329 = sshll.u32 %s6, 4
      %s330 = int_to_ptr.hbm [resolvable:$true] %s329
      %332 = dma.vmem_to_hbm [thread:$0]  %s328, 128, %s330, [#allocation4]
    $region45: #{tpu_custom_call.1} parent=1 // pred_fallthru
      _
    // Predicated region
    $region46: #{tpu_custom_call.1} parent=1 // pred_check
      _
    $region47: #{tpu_custom_call.1} parent=1 // pred_check_branch
      %334 = sbr.rel (0) target = $region49
    $region48: #{tpu_custom_call.1} parent=1 // pred_region
      %336 = dma.done [#allocation4], 128
    $region49: #{tpu_custom_call.1} parent=1 // pred_fallthru
      _
    %337 = vsyncpa [#allocation3], 1
    %338 = vsyncpa [#allocation6], 1
    %339 = vsyncpa [#allocation9], 1
    %340 = vsyncpa [#allocation4], 1

</llo_original>
